<compile_context>
chip_gen: v6e
topology: v6e:2x2x1
jax: 0.10.0
libtpu: 0.0.40
codegen_flags: <defaults>
</compile_context>

<pallas_src>
import functools
import math

import jax
import jax.numpy as jnp
from jax.experimental import pallas as pl
from jax.experimental.pallas import tpu as pltpu


def _supcon_kernel(fq_ref, fk_ref, lq_ref, lk_ref, loss_ref, *,
                   sqrt_inv_temp, inv_temp, scale_out,
                   pos_weight, neg_weight, mm_dtype):
    # fq_ref: (1, TB, TQ, D)   query-row chunk of the feature block
    # fk_ref: (1, TB, R,  D)   full key-side feature block (constant over q)
    # lq_ref: (1, TB, TQ) i32, lk_ref: (1, TB, R) i32, loss_ref: (1, TB, TQ) f32
    xq = fq_ref[0].astype(jnp.float32)                    # [TB, TQ, D]
    xk = fk_ref[0].astype(jnp.float32)                    # [TB, R,  D]
    lq = lq_ref[0]                                        # [TB, TQ]
    lk = lk_ref[0]                                        # [TB, R]
    TB, TQ, D = xq.shape
    R = xk.shape[1]

    # L2 normalize (f32), folding 1/temperature into the operands so
    # s = (f @ f.T) / temperature needs no extra [TQ, R] scaling pass.
    sq = jnp.sum(xq * xq, axis=-1, keepdims=True)         # [TB, TQ, 1]
    sk = jnp.sum(xk * xk, axis=-1, keepdims=True)         # [TB, R, 1]
    inq = jax.lax.rsqrt(jnp.maximum(sq, 1e-24))           # EUP slot
    ink = jax.lax.rsqrt(jnp.maximum(sk, 1e-24))
    fq = (xq * (inq * sqrt_inv_temp)).astype(mm_dtype)    # [TB, TQ, D]
    fk = (xk * (ink * sqrt_inv_temp)).astype(mm_dtype)    # [TB, R, D]

    # Analytic diagonal s_ii = ||f_i||^2 / temperature.  For L2-normalized
    # rows this IS the row max (Cauchy-Schwarz), so use it as the softmax
    # shift instead of a full cross-lane max over [TQ, R] (saves an XLU pass).
    # For an all-zero row it degrades gracefully to 0 (the true row max).
    diag = sq * (inq * inq) * inv_temp                    # [TB, TQ, 1]

    # Batched similarity on the MXU: s[b, q, k] = <fq[b,q], fk[b,k]>.
    # NOTE: nt-form dot_general; if the Mosaic dump shows a per-image vxpose
    # on the key block, hoist it (einshape to [TB, D, R]) — not observed yet.
    s = jax.lax.dot_general(fq, fk, (((2,), (2,)), ((0,), (0,))),
                            preferred_element_type=jnp.float32)   # [TB,TQ,R]

    # Self-exclusion mask: global query index vs. key index.
    q0 = pl.program_id(1) * TQ
    row = q0 + jax.lax.broadcasted_iota(jnp.int32, (TQ, R), 0)
    col = jax.lax.broadcasted_iota(jnp.int32, (TQ, R), 1)
    self_m = (row == col)[None]                           # [1, TQ, R]

    # Numerically stable masked softmax denominator (self excluded exactly).
    e = jnp.exp(jnp.where(self_m, jnp.float32(-1e30), s) - diag)
    denom = jnp.sum(e, axis=-1, keepdims=True)            # [TB, TQ, 1]

    # Positives: same label, excluding self (exact, matmul-consistent).
    same = (lq[:, :, None] == lk[:, None, :])             # [TB, TQ, R]
    pos = jnp.logical_and(same, jnp.logical_not(self_m))
    cnt = jnp.sum(pos.astype(jnp.float32), axis=-1, keepdims=True)
    sum_pos_s = jnp.sum(jnp.where(pos, s, 0.0), axis=-1, keepdims=True)

    # sum_j mask_ij * log_prob_ij with shift c = diag:
    #   pos_w * (sum_pos_s - c*cnt) - neg_w * log(denom) * cnt
    num = (pos_weight * (sum_pos_s - diag * cnt)
           - neg_weight * jnp.log(denom) * cnt)
    mlpp = jnp.where(cnt > 0.5, num / (cnt + 1e-16), 0.0)
    loss = (-scale_out) * mlpp[:, :, 0]                   # [TB, TQ]

    # Dense store: (1, TB, TQ) block -> TB sublanes x TQ lanes, unmasked vst.
    loss_ref[...] = loss[None]


def _vmem_capacity_bytes():
    try:
        cap = int(getattr(pltpu.get_tpu_info(), "vmem_capacity_bytes"))
        if cap > 0:
            return cap
    except Exception:
        pass
    return 64 << 20          # conservative fallback (v7x-sized)


def _num_tensorcores():
    # v4 / v5p / v7x expose 2 TensorCores per device ("parallel" grid axes are
    # sharded across them); v5e / v6e have a single TC.
    try:
        kind = jax.devices()[0].device_kind.lower()
    except Exception:
        return 1
    return 2 if any(tag in kind for tag in ("v4", "v5p", "v7")) else 1


def _choose_tq(R):
    # Query-row tiling bounds the [TB, TQ, R] f32 temporaries at large R.
    if R <= 512 or R % 128 != 0:
        # TODO(synk): unaligned large R would need key-side padding + masking
        # to enable query tiling; fall back to the untiled path.
        return R
    for tq in (512, 256, 128):
        if R % tq == 0:
            return tq
    return R


def _choose_tb(B, R, D, tq, in_bytes, mm_bytes, budget, cores):
    # Per-image VMEM working set (double-buffered inputs/outputs + in-kernel
    # f32 / mm-dtype copies + the [TQ, R]-sized temporaries).
    per_img = (2 * R * D * in_bytes            # key feature block
               + 2 * tq * D * in_bytes         # query feature block
               + 2 * 4 * (R + tq)              # label blocks (i32)
               + 2 * 4 * tq                    # output block
               + (R + tq) * D * (4 + mm_bytes) # normalized f32 + mm copies
               + 5 * tq * R * 4                # s / exp / mask temporaries
               + (64 << 10))
    tb = int(max(1, min(B, budget // max(per_img, 1))))
    if cores > 1 and B >= cores:
        # Give every TensorCore at least one step along the parallel batch
        # axis; on single-TC chips never split a batch that fits one block.
        tb = min(tb, -(-B // cores))
    n_blk = -(-B // tb)
    return tb, n_blk


def supcon_loss(features, labels, *, temperature=0.07, contrast_mode='all',
                base_temperature=0.07, pn_ratio=0.5, reduction='mean',
                precision='bf16'):
    """features: [B, R, D] float, labels: [B, R] int.  Returns a scalar for
    reduction='mean'/'sum', or per-(image, ray) losses [B, R] for 'none'.

    precision: 'bf16' (default; f32 MXU accumulation) or 'float32' for an
    exact similarity matmul."""
    assert contrast_mode == 'all'
    B, R, D = features.shape
    assert labels.shape == (B, R)
    pos_w = float(min(1.0, pn_ratio * 2.0))
    neg_w = float(min(1.0, (1.0 - pn_ratio) * 2.0))

    if precision in ('bf16', 'bfloat16'):
        mm_dtype = jnp.bfloat16
    elif precision in ('f32', 'float32', 'highest'):
        mm_dtype = jnp.float32
    else:
        raise ValueError(f"unknown precision {precision!r}")

    tq = _choose_tq(R)
    assert R % tq == 0
    n_q = R // tq

    cap = _vmem_capacity_bytes()
    budget = max(12 << 20, min(cap // 3, 48 << 20))
    vmem_limit = int(min(max(cap * 3 // 4, 32 << 20), 96 << 20))
    cores = _num_tensorcores()
    tb, n_blk = _choose_tb(B, R, D, tq, features.dtype.itemsize,
                           jnp.dtype(mm_dtype).itemsize, budget, cores)
    Bp = n_blk * tb

    labels_i = labels.astype(jnp.int32)
    if Bp != B:
        # TODO(synk): padded images are fully computed and sliced off below;
        # a pl.when on the block index could skip the wasted work.
        features = jnp.pad(features, ((0, Bp - B), (0, 0), (0, 0)))
        labels_i = jnp.pad(labels_i, ((0, Bp - B), (0, 0)))

    # (n_blk, TB, ...) layout: every block spans the full trailing dims, so
    # the (8, 128) block constraint is satisfied for any TB and the label /
    # loss tiles are sublane+lane dense.
    feat4 = features.reshape(n_blk, tb, R, D)
    lab3 = labels_i.reshape(n_blk, tb, R)

    kernel = functools.partial(
        _supcon_kernel,
        sqrt_inv_temp=float(1.0 / math.sqrt(temperature)),
        inv_temp=float(1.0 / temperature),
        scale_out=float(temperature / base_temperature),
        pos_weight=pos_w, neg_weight=neg_w, mm_dtype=mm_dtype)

    ib = features.dtype.itemsize
    cost = pl.CostEstimate(
        flops=int(2 * B * R * R * D + 8 * B * R * D + 6 * B * R * R),
        transcendentals=int(B * R * R + 2 * B * R),
        bytes_accessed=int(2 * B * R * D * ib + 12 * B * R))

    out = pl.pallas_call(
        kernel,
        out_shape=jax.ShapeDtypeStruct((n_blk, tb, R), jnp.float32),
        grid_spec=pltpu.PrefetchScalarGridSpec(
            num_scalar_prefetch=0,
            grid=(n_blk, n_q),          # q innermost: key block DMA'd once/i
            in_specs=[
                pl.BlockSpec((1, tb, tq, D), lambda i, q: (i, 0, q, 0)),
                pl.BlockSpec((1, tb, R, D), lambda i, q: (i, 0, 0, 0)),
                pl.BlockSpec((1, tb, tq), lambda i, q: (i, 0, q)),
                pl.BlockSpec((1, tb, R), lambda i, q: (i, 0, 0)),
            ],
            out_specs=pl.BlockSpec((1, tb, tq), lambda i, q: (i, 0, q)),
        ),
        compiler_params=pltpu.CompilerParams(
            dimension_semantics=("parallel", "arbitrary"),
            vmem_limit_bytes=vmem_limit),
        cost_estimate=cost,
    )(feat4, feat4, lab3, lab3)

    per_ray = out.reshape(Bp, R)[:B]                      # [B, R]
    if reduction == 'mean':
        return per_ray.mean()
    elif reduction == 'sum':
        return per_ray.sum()
    elif reduction in ('none', None):
        return per_ray
    else:
        raise NotImplementedError(reduction)


def _supcon_loss_ref(features, labels, *, temperature=0.07,
                     base_temperature=0.07, pn_ratio=0.5):
    """Pure-JAX reference mirroring the PyTorch module (anchor_mask=None).
    Returns per-ray losses [B, R]."""
    pos_w = min(1.0, pn_ratio * 2.0)
    neg_w = min(1.0, (1.0 - pn_ratio) * 2.0)
    f = features / jnp.maximum(
        jnp.linalg.norm(features, axis=-1, keepdims=True), 1e-12)

    def per_image(x, l):
        R = x.shape[0]
        mask = (l[:, None] == l[None, :]).astype(jnp.float32)
        s = (x @ x.T) / temperature
        logits = s - jnp.max(s, axis=1, keepdims=True)
        logits_mask = 1.0 - jnp.eye(R, dtype=jnp.float32)
        mask = mask * logits_mask
        exp_logits = jnp.exp(logits) * logits_mask
        log_prob = pos_w * logits - neg_w * jnp.log(
            jnp.sum(exp_logits, axis=1, keepdims=True))
        mlpp = jnp.sum(mask * log_prob, axis=1) / (jnp.sum(mask, axis=1) + 1e-16)
        return -(temperature / base_temperature) * mlpp

    return jax.vmap(per_image)(f, labels)


if __name__ == "__main__":
    key = jax.random.PRNGKey(0)
    kf1, kl1, kf2, kl2 = jax.random.split(key, 4)

    # Case 1: tiny shapes, exact (f32) similarity matmul, tight tolerance.
    B, R, D = 4, 16, 32
    feats = jax.random.normal(kf1, (B, R, D), dtype=jnp.float32)
    labs = jax.random.randint(kl1, (B, R), 0, 3, dtype=jnp.int32)
    out = jax.block_until_ready(
        supcon_loss(feats, labs, reduction='mean', precision='float32'))
    ref = _supcon_loss_ref(feats, labs).mean()
    assert jnp.allclose(out, ref, rtol=1e-4, atol=1e-4), (out, ref)

    # Case 2: default bf16 similarity matmul (relaxed tolerance).
    out_bf = jax.block_until_ready(supcon_loss(feats, labs, reduction='mean'))
    assert jnp.allclose(out_bf, ref, rtol=5e-2, atol=5e-2), (out_bf, ref)

    # Case 3: R = 640 (> 512, multiple of 128) exercises the query-row tiling
    # path and unequal pos/neg weights (pn_ratio != 0.5), per-ray comparison.
    B2, R2, D2 = 2, 640, 32
    feats2 = jax.random.normal(kf2, (B2, R2, D2), dtype=jnp.float32)
    labs2 = jax.random.randint(kl2, (B2, R2), 0, 5, dtype=jnp.int32)
    out2 = jax.block_until_ready(
        supcon_loss(feats2, labs2, reduction='none', pn_ratio=0.3,
                    precision='float32'))
    ref2 = _supcon_loss_ref(feats2, labs2, pn_ratio=0.3)
    assert jnp.allclose(out2, ref2, rtol=1e-3, atol=2e-3), (
        float(jnp.abs(out2 - ref2).max()))

    print("KERNEL_OK")
</pallas_src>

<mosaic_0001>
module attributes {stable_mosaic.version = 11 : i64} {
  func.func @_supcon_kernel(%arg0: i32, %arg1: i32, %arg2: memref<1x4x16x32xf32, #tpu.memory_space<vmem>>, %arg3: memref<1x4x16x32xf32, #tpu.memory_space<vmem>>, %arg4: memref<1x4x16xi32, #tpu.memory_space<vmem>>, %arg5: memref<1x4x16xi32, #tpu.memory_space<vmem>>, %arg6: memref<1x4x16xf32, #tpu.memory_space<vmem>>) attributes {dimension_semantics = [#tpu.dimension_semantics<parallel>, #tpu.dimension_semantics<arbitrary>], iteration_bounds = array<i64: 1, 1>, scalar_prefetch = 0 : i64, scratch_operands = 0 : i64, tpu.core_type = #tpu.core_type<tc>, window_params = [{transform_indices = @transform_0, window_bounds = array<i64: 1, 4, 16, 32>}, {transform_indices = @transform_1, window_bounds = array<i64: 1, 4, 16, 32>}, {transform_indices = @transform_2, window_bounds = array<i64: 1, 4, 16>}, {transform_indices = @transform_3, window_bounds = array<i64: 1, 4, 16>}, {transform_indices = @transform_4, window_bounds = array<i64: 1, 4, 16>}]} {
    %c0 = arith.constant 0 : index
    %c0_0 = arith.constant 0 : index
    %c0_1 = arith.constant 0 : index
    %c0_2 = arith.constant 0 : index
    %0 = vector.load %arg2[%c0, %c0_0, %c0_1, %c0_2] : memref<1x4x16x32xf32, #tpu.memory_space<vmem>>, vector<1x4x16x32xf32>
    %1 = vector.shape_cast %0 : vector<1x4x16x32xf32> to vector<4x16x32xf32>
    %c0_3 = arith.constant 0 : index
    %c0_4 = arith.constant 0 : index
    %c0_5 = arith.constant 0 : index
    %c0_6 = arith.constant 0 : index
    %2 = vector.load %arg3[%c0_3, %c0_4, %c0_5, %c0_6] : memref<1x4x16x32xf32, #tpu.memory_space<vmem>>, vector<1x4x16x32xf32>
    %3 = vector.shape_cast %2 : vector<1x4x16x32xf32> to vector<4x16x32xf32>
    %c0_7 = arith.constant 0 : index
    %c0_8 = arith.constant 0 : index
    %c0_9 = arith.constant 0 : index
    %4 = vector.load %arg4[%c0_7, %c0_8, %c0_9] : memref<1x4x16xi32, #tpu.memory_space<vmem>>, vector<1x4x16xi32>
    %5 = vector.shape_cast %4 : vector<1x4x16xi32> to vector<4x16xi32>
    %c0_10 = arith.constant 0 : index
    %c0_11 = arith.constant 0 : index
    %c0_12 = arith.constant 0 : index
    %6 = vector.load %arg5[%c0_10, %c0_11, %c0_12] : memref<1x4x16xi32, #tpu.memory_space<vmem>>, vector<1x4x16xi32>
    %7 = vector.shape_cast %6 : vector<1x4x16xi32> to vector<4x16xi32>
    %8 = arith.mulf %1, %1 : vector<4x16x32xf32>
    %cst = arith.constant dense<0.000000e+00> : vector<4x16xf32>
    %9 = vector.multi_reduction <add>, %8, %cst [2] : vector<4x16x32xf32> to vector<4x16xf32>
    %10 = vector.shape_cast %9 : vector<4x16xf32> to vector<4x16x1xf32>
    %11 = arith.mulf %3, %3 : vector<4x16x32xf32>
    %cst_13 = arith.constant dense<0.000000e+00> : vector<4x16xf32>
    %12 = vector.multi_reduction <add>, %11, %cst_13 [2] : vector<4x16x32xf32> to vector<4x16xf32>
    %13 = vector.shape_cast %12 : vector<4x16xf32> to vector<4x16x1xf32>
    %cst_14 = arith.constant 1.000000e-24 : f32
    %14 = vector.broadcast %cst_14 : f32 to vector<4x16x1xf32>
    %15 = arith.maximumf %10, %14 : vector<4x16x1xf32>
    %16 = math.rsqrt %15 : vector<4x16x1xf32>
    %cst_15 = arith.constant 1.000000e-24 : f32
    %17 = vector.broadcast %cst_15 : f32 to vector<4x16x1xf32>
    %18 = arith.maximumf %13, %17 : vector<4x16x1xf32>
    %19 = math.rsqrt %18 : vector<4x16x1xf32>
    %cst_16 = arith.constant 3.77964473 : f32
    %20 = vector.broadcast %cst_16 : f32 to vector<4x16x1xf32>
    %21 = arith.mulf %16, %20 : vector<4x16x1xf32>
    %22 = vector.broadcast %21 : vector<4x16x1xf32> to vector<4x16x32xf32>
    %23 = arith.mulf %1, %22 : vector<4x16x32xf32>
    %cst_17 = arith.constant 3.77964473 : f32
    %24 = vector.broadcast %cst_17 : f32 to vector<4x16x1xf32>
    %25 = arith.mulf %19, %24 : vector<4x16x1xf32>
    %26 = vector.broadcast %25 : vector<4x16x1xf32> to vector<4x16x32xf32>
    %27 = arith.mulf %3, %26 : vector<4x16x32xf32>
    %28 = arith.mulf %16, %16 : vector<4x16x1xf32>
    %29 = arith.mulf %10, %28 : vector<4x16x1xf32>
    %cst_18 = arith.constant 14.2857141 : f32
    %30 = vector.broadcast %cst_18 : f32 to vector<4x16x1xf32>
    %31 = arith.mulf %29, %30 : vector<4x16x1xf32>
    %cst_19 = arith.constant dense<0.000000e+00> : vector<4x16x16xf32>
    %32 = tpu.matmul %23, %27, %cst_19 {dimension_numbers = #tpu.dot_dimension_numbers<[2], [2], [1], [1], [0, 0, 0, 1, 1, 1], [0], [0]>} : vector<4x16x32xf32>, vector<4x16x32xf32>, vector<4x16x16xf32> -> vector<4x16x16xf32>
    %c16_i32 = arith.constant 16 : i32
    %33 = arith.muli %arg1, %c16_i32 : i32
    %34 = tpu.iota {dimensions = array<i32: 0>} : vector<16x16xi32>
    %35 = vector.broadcast %33 : i32 to vector<16x16xi32>
    %36 = arith.addi %35, %34 : vector<16x16xi32>
    %37 = tpu.iota {dimensions = array<i32: 1>} : vector<16x16xi32>
    %38 = arith.cmpi eq, %36, %37 : vector<16x16xi32>
    %39 = vector.shape_cast %38 : vector<16x16xi1> to vector<1x16x16xi1>
    %cst_20 = arith.constant -1.000000e+30 : f32
    %40 = vector.shape_cast %39 : vector<1x16x16xi1> to vector<1x16x16xi1>
    %41 = vector.broadcast %40 : vector<1x16x16xi1> to vector<4x16x16xi1>
    %42 = vector.broadcast %cst_20 : f32 to vector<4x16x16xf32>
    %43 = arith.select %41, %42, %32 : vector<4x16x16xi1>, vector<4x16x16xf32>
    %44 = vector.broadcast %31 : vector<4x16x1xf32> to vector<4x16x16xf32>
    %45 = arith.subf %43, %44 : vector<4x16x16xf32>
    %46 = math.exp %45 : vector<4x16x16xf32>
    %cst_21 = arith.constant dense<0.000000e+00> : vector<4x16xf32>
    %47 = vector.multi_reduction <add>, %46, %cst_21 [2] : vector<4x16x16xf32> to vector<4x16xf32>
    %48 = vector.shape_cast %47 : vector<4x16xf32> to vector<4x16x1xf32>
    %49 = vector.shape_cast %5 : vector<4x16xi32> to vector<4x16x1xi32>
    %50 = vector.shape_cast %7 : vector<4x16xi32> to vector<4x1x16xi32>
    %51 = vector.broadcast %49 : vector<4x16x1xi32> to vector<4x16x16xi32>
    %52 = vector.broadcast %50 : vector<4x1x16xi32> to vector<4x16x16xi32>
    %53 = arith.cmpi eq, %51, %52 : vector<4x16x16xi32>
    %cst_22 = arith.constant dense<true> : vector<1x16x16xi1>
    %54 = arith.xori %39, %cst_22 : vector<1x16x16xi1>
    %55 = vector.broadcast %54 : vector<1x16x16xi1> to vector<4x16x16xi1>
    %56 = arith.andi %53, %55 : vector<4x16x16xi1>
    %57 = arith.extui %56 : vector<4x16x16xi1> to vector<4x16x16xi32>
    %58 = arith.sitofp %57 : vector<4x16x16xi32> to vector<4x16x16xf32>
    %cst_23 = arith.constant dense<0.000000e+00> : vector<4x16xf32>
    %59 = vector.multi_reduction <add>, %58, %cst_23 [2] : vector<4x16x16xf32> to vector<4x16xf32>
    %60 = vector.shape_cast %59 : vector<4x16xf32> to vector<4x16x1xf32>
    %cst_24 = arith.constant 0.000000e+00 : f32
    %61 = vector.broadcast %cst_24 : f32 to vector<4x16x16xf32>
    %62 = arith.select %56, %32, %61 : vector<4x16x16xi1>, vector<4x16x16xf32>
    %cst_25 = arith.constant dense<0.000000e+00> : vector<4x16xf32>
    %63 = vector.multi_reduction <add>, %62, %cst_25 [2] : vector<4x16x16xf32> to vector<4x16xf32>
    %64 = vector.shape_cast %63 : vector<4x16xf32> to vector<4x16x1xf32>
    %65 = arith.mulf %31, %60 : vector<4x16x1xf32>
    %66 = arith.subf %64, %65 : vector<4x16x1xf32>
    %cst_26 = arith.constant 1.000000e+00 : f32
    %67 = vector.broadcast %cst_26 : f32 to vector<4x16x1xf32>
    %68 = arith.mulf %67, %66 : vector<4x16x1xf32>
    %69 = math.log %48 : vector<4x16x1xf32>
    %cst_27 = arith.constant 1.000000e+00 : f32
    %70 = vector.broadcast %cst_27 : f32 to vector<4x16x1xf32>
    %71 = arith.mulf %70, %69 : vector<4x16x1xf32>
    %72 = arith.mulf %71, %60 : vector<4x16x1xf32>
    %73 = arith.subf %68, %72 : vector<4x16x1xf32>
    %cst_28 = arith.constant 5.000000e-01 : f32
    %74 = vector.broadcast %cst_28 : f32 to vector<4x16x1xf32>
    %75 = arith.cmpf ogt, %60, %74 : vector<4x16x1xf32>
    %cst_29 = arith.constant 1.000000e-16 : f32
    %76 = vector.broadcast %cst_29 : f32 to vector<4x16x1xf32>
    %77 = arith.addf %60, %76 : vector<4x16x1xf32>
    %78 = arith.divf %73, %77 : vector<4x16x1xf32>
    %cst_30 = arith.constant 0.000000e+00 : f32
    %79 = vector.broadcast %cst_30 : f32 to vector<4x16x1xf32>
    %80 = arith.select %75, %78, %79 : vector<4x16x1xi1>, vector<4x16x1xf32>
    %81 = vector.shape_cast %80 : vector<4x16x1xf32> to vector<4x16xf32>
    %cst_31 = arith.constant -1.000000e+00 : f32
    %82 = vector.broadcast %cst_31 : f32 to vector<4x16xf32>
    %83 = arith.mulf %82, %81 : vector<4x16xf32>
    %84 = vector.shape_cast %83 : vector<4x16xf32> to vector<1x4x16xf32>
    %c0_32 = arith.constant 0 : index
    %c0_33 = arith.constant 0 : index
    %c0_34 = arith.constant 0 : index
    %85 = vector.load %arg6[%c0_32, %c0_33, %c0_34] : memref<1x4x16xf32, #tpu.memory_space<vmem>>, vector<1x4x16xf32>
    tpu.vector_store %arg6[%c0_32, %c0_33, %c0_34], %84 {strides = array<i32>} : memref<1x4x16xf32, #tpu.memory_space<vmem>>, vector<1x4x16xf32>,
    return
  }
  func.func @transform_0(%arg0: i32, %arg1: i32) -> (i32, i32, i32, i32) {
    %c0_i32 = arith.constant 0 : i32
    %c0_i32_0 = arith.constant 0 : i32
    %c0_i32_1 = arith.constant 0 : i32
    return %arg0, %c0_i32, %arg1, %c0_i32_0 : i32, i32, i32, i32
  }
  func.func @transform_1(%arg0: i32, %arg1: i32) -> (i32, i32, i32, i32) {
    %c0_i32 = arith.constant 0 : i32
    %c0_i32_0 = arith.constant 0 : i32
    %c0_i32_1 = arith.constant 0 : i32
    %c0_i32_2 = arith.constant 0 : i32
    return %arg0, %c0_i32, %c0_i32_0, %c0_i32_1 : i32, i32, i32, i32
  }
  func.func @transform_2(%arg0: i32, %arg1: i32) -> (i32, i32, i32) {
    %c0_i32 = arith.constant 0 : i32
    %c0_i32_0 = arith.constant 0 : i32
    return %arg0, %c0_i32, %arg1 : i32, i32, i32
  }
  func.func @transform_3(%arg0: i32, %arg1: i32) -> (i32, i32, i32) {
    %c0_i32 = arith.constant 0 : i32
    %c0_i32_0 = arith.constant 0 : i32
    %c0_i32_1 = arith.constant 0 : i32
    return %arg0, %c0_i32, %c0_i32_0 : i32, i32, i32
  }
  func.func @transform_4(%arg0: i32, %arg1: i32) -> (i32, i32, i32) {
    %c0_i32 = arith.constant 0 : i32
    %c0_i32_0 = arith.constant 0 : i32
    return %arg0, %c0_i32, %arg1 : i32, i32, i32
  }
}

</mosaic_0001>

<llo_original>
// kernel: tpu_custom_call.1
$region0: #{tpu_custom_call.1}
  #allocation0 [shape = 'u32[]', space=smem, size = 0x4, offset = 0x4, fixed_abs, tag = 'smem constant byte address 0x4 - core index']
  #allocation1 [shape = 'u32[144,128]{1,0:T(1,128)}', space=vmem, size = 0x12000, scoped, tag = 'internal scratch']
  %s0 = inlined_call_operand.hbm [shape: f32[1,4,16,32], index: 0, kind: input, shape index: {}]
  %s1 = inlined_call_operand.hbm [shape: f32[1,4,16,32], index: 1, kind: input, shape index: {}]
  %s2 = inlined_call_operand.hbm [shape: s32[1,4,16], index: 2, kind: input, shape index: {}]
  %s3 = inlined_call_operand.vmem [shape: s32[1,4,16], index: 3, kind: input, shape index: {}]
  %s4 = inlined_call_operand.hbm [shape: f32[1,4,16], index: 4, kind: output, shape index: {}]
  %s5 = sld [smem:[#allocation0]]
  $region38: #{tpu_custom_call.1} parent=0
    _
  %s7 = ssub.s32 1, %s5
  %s8 = scalar_select 0, %s7, %s5
  $region1: #{tpu_custom_call.1} parent=0
    #allocation2 [shape = 'u8[32768]{0}', space=vmem, size = 0x8000, scoped, tag = 'input window, operand 0, single buffered']
    #allocation3 [shape = 's32[1]{0}', space=sflag, size = 0x4, scoped, tag = 'scoped memory for tpu_custom_call.1']
    #allocation4 [shape = 's32[1]{0}', space=sflag, size = 0x4, scoped, tag = 'scoped memory for tpu_custom_call.1']
    #allocation5 [shape = 'u8[32768]{0}', space=vmem, size = 0x8000, scoped, tag = 'input window, operand 1, single buffered']
    #allocation6 [shape = 's32[1]{0}', space=sflag, size = 0x4, scoped, tag = 'scoped memory for tpu_custom_call.1']
    #allocation7 [shape = 'u8[2048]{0}', space=vmem, size = 0x800, scoped, tag = 'input window, operand 2, single buffered']
    #allocation8 [shape = 'u8[2048]{0}', space=vmem, size = 0x800, scoped, tag = 'output window, operand 0, single buffered']
    %9 = vsyncpa [#allocation3], 0
    %10 = vsyncpa [#allocation6], 0
    %11 = vsyncpa [#allocation4], 0
    // Predicated region
    $region2: #{tpu_custom_call.1} parent=1 // pred_check
      _
    $region3: #{tpu_custom_call.1} parent=1 // pred_check_branch
      %13 = sbr.rel (0) target = $region5
    $region4: #{tpu_custom_call.1} parent=1 // pred_region
      %s15 = ssub.s32 1024, 1024
      %16 = vsyncadd [#allocation3], %s15
      %s17 = sshll.u32 [#allocation2], 4
      %s18 = int_to_ptr.vmem [resolvable:$true] %s17
      %23 = dma.hbm_to_vmem [thread:$0]  %s0, 1024, %s18, [#allocation3], 128, 128, 8
    $region5: #{tpu_custom_call.1} parent=1 // pred_fallthru
      _
    // Predicated region
    $region6: #{tpu_custom_call.1} parent=1 // pred_check
      _
    $region7: #{tpu_custom_call.1} parent=1 // pred_check_branch
      %25 = sbr.rel (0) target = $region9
    $region8: #{tpu_custom_call.1} parent=1 // pred_region
      %s27 = ssub.s32 1024, 1024
      %28 = vsyncadd [#allocation6], %s27
      %s29 = sshll.u32 [#allocation5], 4
      %s30 = int_to_ptr.vmem [resolvable:$true] %s29
      %35 = dma.hbm_to_vmem [thread:$0]  %s1, 1024, %s30, [#allocation6], 128, 128, 8
    $region9: #{tpu_custom_call.1} parent=1 // pred_fallthru
      _
    // Predicated region
    $region10: #{tpu_custom_call.1} parent=1 // pred_check
      _
    $region11: #{tpu_custom_call.1} parent=1 // pred_check_branch
      %37 = sbr.rel (0) target = $region13
    $region12: #{tpu_custom_call.1} parent=1 // pred_region
      %s39 = ssub.s32 64, 64
      %40 = vsyncadd [#allocation6], %s39
      %s42 = sshll.u32 [#allocation7], 4
      %s43 = int_to_ptr.vmem [resolvable:$true] %s42
      %45 = dma.hbm_to_vmem [thread:$0]  %s2, 64, %s43, [#allocation6]
    $region13: #{tpu_custom_call.1} parent=1 // pred_fallthru
      _
    // Predicated region
    $region14: #{tpu_custom_call.1} parent=1 // pred_check
      _
    $region15: #{tpu_custom_call.1} parent=1 // pred_check_branch
      %47 = sbr.rel (0) target = $region17
    $region16: #{tpu_custom_call.1} parent=1 // pred_region
      _
    $region17: #{tpu_custom_call.1} parent=1 // pred_fallthru
      _
    // Predicated region
    $region18: #{tpu_custom_call.1} parent=1 // pred_check
      _
    $region19: #{tpu_custom_call.1} parent=1 // pred_check_branch
      %49 = sbr.rel (0) target = $region21
    $region20: #{tpu_custom_call.1} parent=1 // pred_region
      %50 = dma.done [#allocation3], 1024
    $region21: #{tpu_custom_call.1} parent=1 // pred_fallthru
      _
    // Predicated region
    $region22: #{tpu_custom_call.1} parent=1 // pred_check
      _
    $region23: #{tpu_custom_call.1} parent=1 // pred_check_branch
      %52 = sbr.rel (0) target = $region25
    $region24: #{tpu_custom_call.1} parent=1 // pred_region
      %53 = dma.done [#allocation6], 1024
    $region25: #{tpu_custom_call.1} parent=1 // pred_fallthru
      _
    // Predicated region
    $region26: #{tpu_custom_call.1} parent=1 // pred_check
      _
    $region27: #{tpu_custom_call.1} parent=1 // pred_check_branch
      %55 = sbr.rel (0) target = $region29
    $region28: #{tpu_custom_call.1} parent=1 // pred_region
      %56 = dma.done [#allocation6], 64
    $region29: #{tpu_custom_call.1} parent=1 // pred_fallthru
      _
    %v57 = vld [vmem:[#allocation2] sm:$0xff]
    %v58 = vld [vmem:[#allocation2 + $0x8] sm:$0xff]
    %v59 = vld [vmem:[#allocation2 + $0x10] sm:$0xff]
    %v60 = vld [vmem:[#allocation2 + $0x18] sm:$0xff]
    %v61 = vld [vmem:[#allocation2 + $0x20] sm:$0xff]
    %v62 = vld [vmem:[#allocation2 + $0x28] sm:$0xff]
    %v63 = vld [vmem:[#allocation2 + $0x30] sm:$0xff]
    %v64 = vld [vmem:[#allocation2 + $0x38] sm:$0xff]
    %v65 = vld [vmem:[#allocation5] sm:$0xff]
    %v66 = vld [vmem:[#allocation5 + $0x8] sm:$0xff]
    %v67 = vld [vmem:[#allocation5 + $0x10] sm:$0xff]
    %v68 = vld [vmem:[#allocation5 + $0x18] sm:$0xff]
    %v69 = vld [vmem:[#allocation5 + $0x20] sm:$0xff]
    %v70 = vld [vmem:[#allocation5 + $0x28] sm:$0xff]
    %v71 = vld [vmem:[#allocation5 + $0x30] sm:$0xff]
    %v72 = vld [vmem:[#allocation5 + $0x38] sm:$0xff]
    %v73 = vld [vmem:[#allocation7] sm:$0xf]
    %v74 = vld [vmem:[%s3] sm:$0xf]
    %v75 = vmul.f32 %v57, %v57
    %v76 = vmul.f32 %v58, %v58
    %v77 = vmul.f32 %v59, %v59
    %v78 = vmul.f32 %v60, %v60
    %v79 = vmul.f32 %v61, %v61
    %v80 = vmul.f32 %v62, %v62
    %v81 = vmul.f32 %v63, %v63
    %v82 = vmul.f32 %v64, %v64
    %vm83 = vcmask 261120
    %v84 = vsel %vm83, %v75, 0.0
    %85 = vadd.xlane.f32.xlu0 %v84
    %v86 = vpop.xlane.xlu0 %85
    %v87 = vsel %vm83, %v76, 0.0
    %88 = vadd.xlane.f32.xlu0 %v87
    %v89 = vpop.xlane.xlu0 %88
    %v90 = vsel %vm83, %v77, 0.0
    %91 = vadd.xlane.f32.xlu0 %v90
    %v92 = vpop.xlane.xlu0 %91
    %v93 = vsel %vm83, %v78, 0.0
    %94 = vadd.xlane.f32.xlu0 %v93
    %v95 = vpop.xlane.xlu0 %94
    %v96 = vsel %vm83, %v79, 0.0
    %97 = vadd.xlane.f32.xlu0 %v96
    %v98 = vpop.xlane.xlu0 %97
    %v99 = vsel %vm83, %v80, 0.0
    %100 = vadd.xlane.f32.xlu0 %v99
    %v101 = vpop.xlane.xlu0 %100
    %v102 = vsel %vm83, %v81, 0.0
    %103 = vadd.xlane.f32.xlu0 %v102
    %v104 = vpop.xlane.xlu0 %103
    %v105 = vsel %vm83, %v82, 0.0
    %106 = vadd.xlane.f32.xlu0 %v105
    %v107 = vpop.xlane.xlu0 %106
    %v108 = vmul.f32 %v65, %v65
    %v109 = vmul.f32 %v66, %v66
    %v110 = vmul.f32 %v67, %v67
    %v111 = vmul.f32 %v68, %v68
    %v112 = vmul.f32 %v69, %v69
    %v113 = vmul.f32 %v70, %v70
    %v114 = vmul.f32 %v71, %v71
    %v115 = vmul.f32 %v72, %v72
    %v116 = vsel %vm83, %v108, 0.0
    %117 = vadd.xlane.f32.xlu0 %v116
    %v118 = vpop.xlane.xlu0 %117
    %v119 = vsel %vm83, %v109, 0.0
    %120 = vadd.xlane.f32.xlu0 %v119
    %v121 = vpop.xlane.xlu0 %120
    %v122 = vsel %vm83, %v110, 0.0
    %123 = vadd.xlane.f32.xlu0 %v122
    %v124 = vpop.xlane.xlu0 %123
    %v125 = vsel %vm83, %v111, 0.0
    %126 = vadd.xlane.f32.xlu0 %v125
    %v127 = vpop.xlane.xlu0 %126
    %v128 = vsel %vm83, %v112, 0.0
    %129 = vadd.xlane.f32.xlu0 %v128
    %v130 = vpop.xlane.xlu0 %129
    %v131 = vsel %vm83, %v113, 0.0
    %132 = vadd.xlane.f32.xlu0 %v131
    %v133 = vpop.xlane.xlu0 %132
    %v134 = vsel %vm83, %v114, 0.0
    %135 = vadd.xlane.f32.xlu0 %v134
    %v136 = vpop.xlane.xlu0 %135
    %v137 = vsel %vm83, %v115, 0.0
    %138 = vadd.xlane.f32.xlu0 %v137
    %v139 = vpop.xlane.xlu0 %138
    %v140 = vmax.f32 %v86, 1e-24
    %v141 = vmax.f32 %v89, 1e-24
    %v142 = vmax.f32 %v92, 1e-24
    %v143 = vmax.f32 %v95, 1e-24
    %v144 = vmax.f32 %v98, 1e-24
    %v145 = vmax.f32 %v101, 1e-24
    %v146 = vmax.f32 %v104, 1e-24
    %v147 = vmax.f32 %v107, 1e-24
    %v148 = vrsqrt.pop %v140
    %v149 = vrsqrt.pop %v141
    %v150 = vrsqrt.pop %v142
    %v151 = vrsqrt.pop %v143
    %v152 = vrsqrt.pop %v144
    %v153 = vrsqrt.pop %v145
    %v154 = vrsqrt.pop %v146
    %v155 = vrsqrt.pop %v147
    %v156 = vmax.f32 %v118, 1e-24
    %v157 = vmax.f32 %v121, 1e-24
    %v158 = vmax.f32 %v124, 1e-24
    %v159 = vmax.f32 %v127, 1e-24
    %v160 = vmax.f32 %v130, 1e-24
    %v161 = vmax.f32 %v133, 1e-24
    %v162 = vmax.f32 %v136, 1e-24
    %v163 = vmax.f32 %v139, 1e-24
    %v164 = vrsqrt.pop %v156
    %v165 = vrsqrt.pop %v157
    %v166 = vrsqrt.pop %v158
    %v167 = vrsqrt.pop %v159
    %v168 = vrsqrt.pop %v160
    %v169 = vrsqrt.pop %v161
    %v170 = vrsqrt.pop %v162
    %v171 = vrsqrt.pop %v163
    %v172 = vmul.f32 %v148, 3.7796447
    %v173 = vmul.f32 %v149, 3.7796447
    %v174 = vmul.f32 %v150, 3.7796447
    %v175 = vmul.f32 %v151, 3.7796447
    %v176 = vmul.f32 %v152, 3.7796447
    %v177 = vmul.f32 %v153, 3.7796447
    %v178 = vmul.f32 %v154, 3.7796447
    %v179 = vmul.f32 %v155, 3.7796447
    %v180 = vmul.f32 %v57, %v172
    %v181 = vmul.f32 %v58, %v173
    %v182 = vmul.f32 %v59, %v174
    %v183 = vmul.f32 %v60, %v175
    %v184 = vmul.f32 %v61, %v176
    %v185 = vmul.f32 %v62, %v177
    %v186 = vmul.f32 %v63, %v178
    %v187 = vmul.f32 %v64, %v179
    %v188 = vmul.f32 %v164, 3.7796447
    %v189 = vmul.f32 %v165, 3.7796447
    %v190 = vmul.f32 %v166, 3.7796447
    %v191 = vmul.f32 %v167, 3.7796447
    %v192 = vmul.f32 %v168, 3.7796447
    %v193 = vmul.f32 %v169, 3.7796447
    %v194 = vmul.f32 %v170, 3.7796447
    %v195 = vmul.f32 %v171, 3.7796447
    %v196 = vmul.f32 %v65, %v188
    %v197 = vmul.f32 %v66, %v189
    %v198 = vmul.f32 %v67, %v190
    %v199 = vmul.f32 %v68, %v191
    %v200 = vmul.f32 %v69, %v192
    %v201 = vmul.f32 %v70, %v193
    %v202 = vmul.f32 %v71, %v194
    %v203 = vmul.f32 %v72, %v195
    %v204 = vmul.f32 %v148, %v148
    %v205 = vmul.f32 %v149, %v149
    %v206 = vmul.f32 %v150, %v150
    %v207 = vmul.f32 %v151, %v151
    %v208 = vmul.f32 %v152, %v152
    %v209 = vmul.f32 %v153, %v153
    %v210 = vmul.f32 %v154, %v154
    %v211 = vmul.f32 %v155, %v155
    %v212 = vmul.f32 %v86, %v204
    %v213 = vmul.f32 %v89, %v205
    %v214 = vmul.f32 %v92, %v206
    %v215 = vmul.f32 %v95, %v207
    %v216 = vmul.f32 %v98, %v208
    %v217 = vmul.f32 %v101, %v209
    %v218 = vmul.f32 %v104, %v210
    %v219 = vmul.f32 %v107, %v211
    %v220 = vmul.f32 %v212, 14.285714
    %v221 = vmul.f32 %v213, 14.285714
    %v222 = vmul.f32 %v214, 14.285714
    %v223 = vmul.f32 %v215, 14.285714
    %v224 = vmul.f32 %v216, 14.285714
    %v225 = vmul.f32 %v217, 14.285714
    %v226 = vmul.f32 %v218, 14.285714
    %v227 = vmul.f32 %v219, 14.285714
    %v229 = vsel %vm83, %v180, 0
    %v232 = vsel %vm83, %v181, 0
    %v235 = vsel %vm83, %v196, 0
    %v238 = vsel %vm83, %v197, 0
    %240 = vmatprep.subr.mxu0 0.0
    %241 = vmatpush1.xpose.msra.mxu0 0.0
    %242 = vmatprep.subr.mxu0 0.0
    %243 = vmatpush1.xpose.msra.mxu0 0.0
    %244 = vmatprep.subr.mxu0 0.0
    %245 = vmatpush1.xpose.msra.mxu0 0.0
    %246 = vmatprep.subr.mxu0 0.0
    %247 = vmatpush1.xpose.msra.mxu0 0.0
    %248 = vmatprep.subr.mxu0 0.0
    %249 = vmatpush1.xpose.msra.mxu0 0.0
    %250 = vmatprep.subr.mxu0 0.0
    %251 = vmatpush1.xpose.msra.mxu0 0.0
    %252 = vmatprep.subr.mxu0 0.0
    %253 = vmatpush1.xpose.msra.mxu0 0.0
    %254 = vmatprep.subr.mxu0 0.0
    %255 = vmatpush1.xpose.msra.mxu0 0.0
    %256 = vmatprep.subr.mxu0 0.0
    %257 = vmatpush1.xpose.msra.mxu0 0.0
    %258 = vmatprep.subr.mxu0 0.0
    %259 = vmatpush1.xpose.msra.mxu0 0.0
    %260 = vmatprep.subr.mxu0 0.0
    %261 = vmatpush1.xpose.msra.mxu0 0.0
    %262 = vmatprep.subr.mxu0 0.0
    %263 = vmatpush1.xpose.msra.mxu0 0.0
    %264 = vmatprep.subr.mxu0 0.0
    %265 = vmatpush1.xpose.msra.mxu0 0.0
    %266 = vmatprep.subr.mxu0 0.0
    %267 = vmatpush1.xpose.msra.mxu0 0.0
    %268 = vmatprep.subr.mxu0 0.0
    %269 = vmatpush1.xpose.msra.mxu0 %v238
    %270 = vmatprep.subr.mxu0 0.0
    %271 = vmatpush1.xpose.msra.mxu0 %v235
    %272 = vmatprep.subr.mxu0 0.0
    %273 = vmatpush2.xpose.msra.mxu0 0.0
    %274 = vmatprep.subr.mxu0 0.0
    %275 = vmatpush2.xpose.msra.mxu0 0.0
    %276 = vmatprep.subr.mxu0 0.0
    %277 = vmatpush2.xpose.msra.mxu0 0.0
    %278 = vmatprep.subr.mxu0 0.0
    %279 = vmatpush2.xpose.msra.mxu0 0.0
    %280 = vmatprep.subr.mxu0 0.0
    %281 = vmatpush2.xpose.msra.mxu0 0.0
    %282 = vmatprep.subr.mxu0 0.0
    %283 = vmatpush2.xpose.msra.mxu0 0.0
    %284 = vmatprep.subr.mxu0 0.0
    %285 = vmatpush2.xpose.msra.mxu0 0.0
    %286 = vmatprep.subr.mxu0 0.0
    %287 = vmatpush2.xpose.msra.mxu0 0.0
    %288 = vmatprep.subr.mxu0 0.0
    %289 = vmatpush2.xpose.msra.mxu0 0.0
    %290 = vmatprep.subr.mxu0 0.0
    %291 = vmatpush2.xpose.msra.mxu0 0.0
    %292 = vmatprep.subr.mxu0 0.0
    %293 = vmatpush2.xpose.msra.mxu0 0.0
    %294 = vmatprep.subr.mxu0 0.0
    %295 = vmatpush2.xpose.msra.mxu0 0.0
    %296 = vmatprep.subr.mxu0 0.0
    %297 = vmatpush2.xpose.msra.mxu0 0.0
    %298 = vmatprep.subr.mxu0 0.0
    %299 = vmatpush2.xpose.msra.mxu0 0.0
    %300 = vmatprep.subr.mxu0 0.0
    %301 = vmatpush2.xpose.msra.mxu0 0.0
    %302 = vmatprep.subr.mxu0 0.0
    %303 = vmatpush2.xpose.msra.mxu0 0.0
    %304 = vmatprep.mubr.f32.mxu0 0.0
    %305 = vmatmul.mubr.f32.gmra.mxu0 %v229
    %v306 = vpop.f32.mrf.mxu0
    %v307 = vadd.f32 0.0, %v306
    %v308 = vpop.f32.mrf.mxu0
    %309 = vmatprep.mubr.f32.mxu0 0.0
    %310 = vmatmul.mubr.f32.gmra.mxu0 %v232
    %v311 = vpop.f32.mrf.mxu0
    %v312 = vadd.f32 0.0, %v311
    %v313 = vpop.f32.mrf.mxu0
    %314 = vdwg.mxu0
    %v316 = vsel %vm83, %v182, 0
    %v319 = vsel %vm83, %v183, 0
    %v322 = vsel %vm83, %v198, 0
    %v325 = vsel %vm83, %v199, 0
    %327 = vmatprep.subr.mxu0 0.0
    %328 = vmatpush1.xpose.msra.mxu0 0.0
    %329 = vmatprep.subr.mxu0 0.0
    %330 = vmatpush1.xpose.msra.mxu0 0.0
    %331 = vmatprep.subr.mxu0 0.0
    %332 = vmatpush1.xpose.msra.mxu0 0.0
    %333 = vmatprep.subr.mxu0 0.0
    %334 = vmatpush1.xpose.msra.mxu0 0.0
    %335 = vmatprep.subr.mxu0 0.0
    %336 = vmatpush1.xpose.msra.mxu0 0.0
    %337 = vmatprep.subr.mxu0 0.0
    %338 = vmatpush1.xpose.msra.mxu0 0.0
    %339 = vmatprep.subr.mxu0 0.0
    %340 = vmatpush1.xpose.msra.mxu0 0.0
    %341 = vmatprep.subr.mxu0 0.0
    %342 = vmatpush1.xpose.msra.mxu0 0.0
    %343 = vmatprep.subr.mxu0 0.0
    %344 = vmatpush1.xpose.msra.mxu0 0.0
    %345 = vmatprep.subr.mxu0 0.0
    %346 = vmatpush1.xpose.msra.mxu0 0.0
    %347 = vmatprep.subr.mxu0 0.0
    %348 = vmatpush1.xpose.msra.mxu0 0.0
    %349 = vmatprep.subr.mxu0 0.0
    %350 = vmatpush1.xpose.msra.mxu0 0.0
    %351 = vmatprep.subr.mxu0 0.0
    %352 = vmatpush1.xpose.msra.mxu0 0.0
    %353 = vmatprep.subr.mxu0 0.0
    %354 = vmatpush1.xpose.msra.mxu0 0.0
    %355 = vmatprep.subr.mxu0 0.0
    %356 = vmatpush1.xpose.msra.mxu0 %v325
    %357 = vmatprep.subr.mxu0 0.0
    %358 = vmatpush1.xpose.msra.mxu0 %v322
    %359 = vmatprep.subr.mxu0 0.0
    %360 = vmatpush2.xpose.msra.mxu0 0.0
    %361 = vmatprep.subr.mxu0 0.0
    %362 = vmatpush2.xpose.msra.mxu0 0.0
    %363 = vmatprep.subr.mxu0 0.0
    %364 = vmatpush2.xpose.msra.mxu0 0.0
    %365 = vmatprep.subr.mxu0 0.0
    %366 = vmatpush2.xpose.msra.mxu0 0.0
    %367 = vmatprep.subr.mxu0 0.0
    %368 = vmatpush2.xpose.msra.mxu0 0.0
    %369 = vmatprep.subr.mxu0 0.0
    %370 = vmatpush2.xpose.msra.mxu0 0.0
    %371 = vmatprep.subr.mxu0 0.0
    %372 = vmatpush2.xpose.msra.mxu0 0.0
    %373 = vmatprep.subr.mxu0 0.0
    %374 = vmatpush2.xpose.msra.mxu0 0.0
    %375 = vmatprep.subr.mxu0 0.0
    %376 = vmatpush2.xpose.msra.mxu0 0.0
    %377 = vmatprep.subr.mxu0 0.0
    %378 = vmatpush2.xpose.msra.mxu0 0.0
    %379 = vmatprep.subr.mxu0 0.0
    %380 = vmatpush2.xpose.msra.mxu0 0.0
    %381 = vmatprep.subr.mxu0 0.0
    %382 = vmatpush2.xpose.msra.mxu0 0.0
    %383 = vmatprep.subr.mxu0 0.0
    %384 = vmatpush2.xpose.msra.mxu0 0.0
    %385 = vmatprep.subr.mxu0 0.0
    %386 = vmatpush2.xpose.msra.mxu0 0.0
    %387 = vmatprep.subr.mxu0 0.0
    %388 = vmatpush2.xpose.msra.mxu0 0.0
    %389 = vmatprep.subr.mxu0 0.0
    %390 = vmatpush2.xpose.msra.mxu0 0.0
    %391 = vmatprep.mubr.f32.mxu0 0.0
    %392 = vmatmul.mubr.f32.gmra.mxu0 %v316
    %v393 = vpop.f32.mrf.mxu0
    %v394 = vadd.f32 0.0, %v393
    %v395 = vpop.f32.mrf.mxu0
    %396 = vmatprep.mubr.f32.mxu0 0.0
    %397 = vmatmul.mubr.f32.gmra.mxu0 %v319
    %v398 = vpop.f32.mrf.mxu0
    %v399 = vadd.f32 0.0, %v398
    %v400 = vpop.f32.mrf.mxu0
    %401 = vdwg.mxu0
    %v403 = vsel %vm83, %v184, 0
    %v406 = vsel %vm83, %v185, 0
    %v409 = vsel %vm83, %v200, 0
    %v412 = vsel %vm83, %v201, 0
    %414 = vmatprep.subr.mxu0 0.0
    %415 = vmatpush1.xpose.msra.mxu0 0.0
    %416 = vmatprep.subr.mxu0 0.0
    %417 = vmatpush1.xpose.msra.mxu0 0.0
    %418 = vmatprep.subr.mxu0 0.0
    %419 = vmatpush1.xpose.msra.mxu0 0.0
    %420 = vmatprep.subr.mxu0 0.0
    %421 = vmatpush1.xpose.msra.mxu0 0.0
    %422 = vmatprep.subr.mxu0 0.0
    %423 = vmatpush1.xpose.msra.mxu0 0.0
    %424 = vmatprep.subr.mxu0 0.0
    %425 = vmatpush1.xpose.msra.mxu0 0.0
    %426 = vmatprep.subr.mxu0 0.0
    %427 = vmatpush1.xpose.msra.mxu0 0.0
    %428 = vmatprep.subr.mxu0 0.0
    %429 = vmatpush1.xpose.msra.mxu0 0.0
    %430 = vmatprep.subr.mxu0 0.0
    %431 = vmatpush1.xpose.msra.mxu0 0.0
    %432 = vmatprep.subr.mxu0 0.0
    %433 = vmatpush1.xpose.msra.mxu0 0.0
    %434 = vmatprep.subr.mxu0 0.0
    %435 = vmatpush1.xpose.msra.mxu0 0.0
    %436 = vmatprep.subr.mxu0 0.0
    %437 = vmatpush1.xpose.msra.mxu0 0.0
    %438 = vmatprep.subr.mxu0 0.0
    %439 = vmatpush1.xpose.msra.mxu0 0.0
    %440 = vmatprep.subr.mxu0 0.0
    %441 = vmatpush1.xpose.msra.mxu0 0.0
    %442 = vmatprep.subr.mxu0 0.0
    %443 = vmatpush1.xpose.msra.mxu0 %v412
    %444 = vmatprep.subr.mxu0 0.0
    %445 = vmatpush1.xpose.msra.mxu0 %v409
    %446 = vmatprep.subr.mxu0 0.0
    %447 = vmatpush2.xpose.msra.mxu0 0.0
    %448 = vmatprep.subr.mxu0 0.0
    %449 = vmatpush2.xpose.msra.mxu0 0.0
    %450 = vmatprep.subr.mxu0 0.0
    %451 = vmatpush2.xpose.msra.mxu0 0.0
    %452 = vmatprep.subr.mxu0 0.0
    %453 = vmatpush2.xpose.msra.mxu0 0.0
    %454 = vmatprep.subr.mxu0 0.0
    %455 = vmatpush2.xpose.msra.mxu0 0.0
    %456 = vmatprep.subr.mxu0 0.0
    %457 = vmatpush2.xpose.msra.mxu0 0.0
    %458 = vmatprep.subr.mxu0 0.0
    %459 = vmatpush2.xpose.msra.mxu0 0.0
    %460 = vmatprep.subr.mxu0 0.0
    %461 = vmatpush2.xpose.msra.mxu0 0.0
    %462 = vmatprep.subr.mxu0 0.0
    %463 = vmatpush2.xpose.msra.mxu0 0.0
    %464 = vmatprep.subr.mxu0 0.0
    %465 = vmatpush2.xpose.msra.mxu0 0.0
    %466 = vmatprep.subr.mxu0 0.0
    %467 = vmatpush2.xpose.msra.mxu0 0.0
    %468 = vmatprep.subr.mxu0 0.0
    %469 = vmatpush2.xpose.msra.mxu0 0.0
    %470 = vmatprep.subr.mxu0 0.0
    %471 = vmatpush2.xpose.msra.mxu0 0.0
    %472 = vmatprep.subr.mxu0 0.0
    %473 = vmatpush2.xpose.msra.mxu0 0.0
    %474 = vmatprep.subr.mxu0 0.0
    %475 = vmatpush2.xpose.msra.mxu0 0.0
    %476 = vmatprep.subr.mxu0 0.0
    %477 = vmatpush2.xpose.msra.mxu0 0.0
    %478 = vmatprep.mubr.f32.mxu0 0.0
    %479 = vmatmul.mubr.f32.gmra.mxu0 %v403
    %v480 = vpop.f32.mrf.mxu0
    %v481 = vadd.f32 0.0, %v480
    %v482 = vpop.f32.mrf.mxu0
    %483 = vmatprep.mubr.f32.mxu0 0.0
    %484 = vmatmul.mubr.f32.gmra.mxu0 %v406
    %v485 = vpop.f32.mrf.mxu0
    %v486 = vadd.f32 0.0, %v485
    %v487 = vpop.f32.mrf.mxu0
    %488 = vdwg.mxu0
    %v490 = vsel %vm83, %v186, 0
    %v493 = vsel %vm83, %v187, 0
    %v496 = vsel %vm83, %v202, 0
    %v499 = vsel %vm83, %v203, 0
    %501 = vmatprep.subr.mxu0 0.0
    %502 = vmatpush1.xpose.msra.mxu0 0.0
    %503 = vmatprep.subr.mxu0 0.0
    %504 = vmatpush1.xpose.msra.mxu0 0.0
    %505 = vmatprep.subr.mxu0 0.0
    %506 = vmatpush1.xpose.msra.mxu0 0.0
    %507 = vmatprep.subr.mxu0 0.0
    %508 = vmatpush1.xpose.msra.mxu0 0.0
    %509 = vmatprep.subr.mxu0 0.0
    %510 = vmatpush1.xpose.msra.mxu0 0.0
    %511 = vmatprep.subr.mxu0 0.0
    %512 = vmatpush1.xpose.msra.mxu0 0.0
    %513 = vmatprep.subr.mxu0 0.0
    %514 = vmatpush1.xpose.msra.mxu0 0.0
    %515 = vmatprep.subr.mxu0 0.0
    %516 = vmatpush1.xpose.msra.mxu0 0.0
    %517 = vmatprep.subr.mxu0 0.0
    %518 = vmatpush1.xpose.msra.mxu0 0.0
    %519 = vmatprep.subr.mxu0 0.0
    %520 = vmatpush1.xpose.msra.mxu0 0.0
    %521 = vmatprep.subr.mxu0 0.0
    %522 = vmatpush1.xpose.msra.mxu0 0.0
    %523 = vmatprep.subr.mxu0 0.0
    %524 = vmatpush1.xpose.msra.mxu0 0.0
    %525 = vmatprep.subr.mxu0 0.0
    %526 = vmatpush1.xpose.msra.mxu0 0.0
    %527 = vmatprep.subr.mxu0 0.0
    %528 = vmatpush1.xpose.msra.mxu0 0.0
    %529 = vmatprep.subr.mxu0 0.0
    %530 = vmatpush1.xpose.msra.mxu0 %v499
    %531 = vmatprep.subr.mxu0 0.0
    %532 = vmatpush1.xpose.msra.mxu0 %v496
    %533 = vmatprep.subr.mxu0 0.0
    %534 = vmatpush2.xpose.msra.mxu0 0.0
    %535 = vmatprep.subr.mxu0 0.0
    %536 = vmatpush2.xpose.msra.mxu0 0.0
    %537 = vmatprep.subr.mxu0 0.0
    %538 = vmatpush2.xpose.msra.mxu0 0.0
    %539 = vmatprep.subr.mxu0 0.0
    %540 = vmatpush2.xpose.msra.mxu0 0.0
    %541 = vmatprep.subr.mxu0 0.0
    %542 = vmatpush2.xpose.msra.mxu0 0.0
    %543 = vmatprep.subr.mxu0 0.0
    %544 = vmatpush2.xpose.msra.mxu0 0.0
    %545 = vmatprep.subr.mxu0 0.0
    %546 = vmatpush2.xpose.msra.mxu0 0.0
    %547 = vmatprep.subr.mxu0 0.0
    %548 = vmatpush2.xpose.msra.mxu0 0.0
    %549 = vmatprep.subr.mxu0 0.0
    %550 = vmatpush2.xpose.msra.mxu0 0.0
    %551 = vmatprep.subr.mxu0 0.0
    %552 = vmatpush2.xpose.msra.mxu0 0.0
    %553 = vmatprep.subr.mxu0 0.0
    %554 = vmatpush2.xpose.msra.mxu0 0.0
    %555 = vmatprep.subr.mxu0 0.0
    %556 = vmatpush2.xpose.msra.mxu0 0.0
    %557 = vmatprep.subr.mxu0 0.0
    %558 = vmatpush2.xpose.msra.mxu0 0.0
    %559 = vmatprep.subr.mxu0 0.0
    %560 = vmatpush2.xpose.msra.mxu0 0.0
    %561 = vmatprep.subr.mxu0 0.0
    %562 = vmatpush2.xpose.msra.mxu0 0.0
    %563 = vmatprep.subr.mxu0 0.0
    %564 = vmatpush2.xpose.msra.mxu0 0.0
    %565 = vmatprep.mubr.f32.mxu0 0.0
    %566 = vmatmul.mubr.f32.gmra.mxu0 %v490
    %v567 = vpop.f32.mrf.mxu0
    %v568 = vadd.f32 0.0, %v567
    %v569 = vpop.f32.mrf.mxu0
    %570 = vmatprep.mubr.f32.mxu0 0.0
    %571 = vmatmul.mubr.f32.gmra.mxu0 %v493
    %v572 = vpop.f32.mrf.mxu0
    %v573 = vadd.f32 0.0, %v572
    %v574 = vpop.f32.mrf.mxu0
    %575 = vdwg.mxu0
    %s576 = smul.u32 0, 16
    %v577 = vlaneseq
    %v578 = vshrl.u32 %v577, 7
    %v579 = vadd.s32 %v578, 8
    %v580 = vstv %s576
    %v581 = vadd.s32 %v580, %v578
    %v582 = vadd.s32 %v580, %v579
    %v583 = vlaneseq
    %v584 = vand.u32 %v583, 127
    %vm585 = vcmp.eq.s32.totalorder %v581, %v584
    %vm586 = vcmp.eq.s32.totalorder %v582, %v584
    %v587 = vsel %vm585, 1, 0
    %v588 = vsel %vm586, 1, 0
    %vm589 = vcmp.eq.s32.totalorder %v587, 1
    %vm590 = vcmp.eq.s32.totalorder %v588, 1
    %v591 = vsel %vm589, -1e+30, %v307
    %v592 = vsel %vm590, -1e+30, %v312
    %v593 = vsel %vm589, -1e+30, %v394
    %v594 = vsel %vm590, -1e+30, %v399
    %v595 = vsel %vm589, -1e+30, %v481
    %v596 = vsel %vm590, -1e+30, %v486
    %v597 = vsel %vm589, -1e+30, %v568
    %v598 = vsel %vm590, -1e+30, %v573
    %v599 = vsub.f32 %v591, %v220
    %v600 = vsub.f32 %v592, %v221
    %v601 = vsub.f32 %v593, %v222
    %v602 = vsub.f32 %v594, %v223
    %v603 = vsub.f32 %v595, %v224
    %v604 = vsub.f32 %v596, %v225
    %v605 = vsub.f32 %v597, %v226
    %v606 = vsub.f32 %v598, %v227
    %v607 = vmul.f32 %v599, 1.442695
    %v608 = vpow.pop %v607
    %v609 = vmul.f32 %v600, 1.442695
    %v610 = vpow.pop %v609
    %v611 = vmul.f32 %v601, 1.442695
    %v612 = vpow.pop %v611
    %v613 = vmul.f32 %v602, 1.442695
    %v614 = vpow.pop %v613
    %v615 = vmul.f32 %v603, 1.442695
    %v616 = vpow.pop %v615
    %v617 = vmul.f32 %v604, 1.442695
    %v618 = vpow.pop %v617
    %v619 = vmul.f32 %v605, 1.442695
    %v620 = vpow.pop %v619
    %v621 = vmul.f32 %v606, 1.442695
    %v622 = vpow.pop %v621
    %vm623 = vcmask 130048
    %v624 = vsel %vm623, %v608, 0.0
    %625 = vadd.xlane.f32.xlu0 %v624
    %v626 = vpop.xlane.xlu0 %625
    %v627 = vsel %vm623, %v610, 0.0
    %628 = vadd.xlane.f32.xlu0 %v627
    %v629 = vpop.xlane.xlu0 %628
    %v630 = vsel %vm623, %v612, 0.0
    %631 = vadd.xlane.f32.xlu0 %v630
    %v632 = vpop.xlane.xlu0 %631
    %v633 = vsel %vm623, %v614, 0.0
    %634 = vadd.xlane.f32.xlu0 %v633
    %v635 = vpop.xlane.xlu0 %634
    %v636 = vsel %vm623, %v616, 0.0
    %637 = vadd.xlane.f32.xlu0 %v636
    %v638 = vpop.xlane.xlu0 %637
    %v639 = vsel %vm623, %v618, 0.0
    %640 = vadd.xlane.f32.xlu0 %v639
    %v641 = vpop.xlane.xlu0 %640
    %v642 = vsel %vm623, %v620, 0.0
    %643 = vadd.xlane.f32.xlu0 %v642
    %v644 = vpop.xlane.xlu0 %643
    %v645 = vsel %vm623, %v622, 0.0
    %646 = vadd.xlane.f32.xlu0 %v645
    %v647 = vpop.xlane.xlu0 %646
    %v648 = vlaneseq
    %v649 = vshrl.u32 %v648, 7
    %v650 = vsub.s32 0, %v649
    %v651 = vrot.slane %v73, %v650
    %653 = vbcast.lane.b32.xlu0 %v651, 256
    %v654 = vpop.permute.xlu0 %653
    %s656 = sor.u32 256, 8
    %657 = vbcast.lane.b32.xlu0 %v651, %s656
    %v658 = vpop.permute.xlu0 %657
    %v659 = vlaneseq
    %v660 = vshrl.u32 %v659, 7
    %v661 = vsub.s32 1, %v660
    %v662 = vrot.slane %v73, %v661
    %664 = vbcast.lane.b32.xlu0 %v662, 256
    %v665 = vpop.permute.xlu0 %664
    %s667 = sor.u32 256, 8
    %668 = vbcast.lane.b32.xlu0 %v662, %s667
    %v669 = vpop.permute.xlu0 %668
    %v670 = vlaneseq
    %v671 = vshrl.u32 %v670, 7
    %v672 = vsub.s32 2, %v671
    %v673 = vrot.slane %v73, %v672
    %675 = vbcast.lane.b32.xlu0 %v673, 256
    %v676 = vpop.permute.xlu0 %675
    %s678 = sor.u32 256, 8
    %679 = vbcast.lane.b32.xlu0 %v673, %s678
    %v680 = vpop.permute.xlu0 %679
    %v681 = vlaneseq
    %v682 = vshrl.u32 %v681, 7
    %v683 = vsub.s32 3, %v682
    %v684 = vrot.slane %v73, %v683
    %686 = vbcast.lane.b32.xlu0 %v684, 256
    %v687 = vpop.permute.xlu0 %686
    %s689 = sor.u32 256, 8
    %690 = vbcast.lane.b32.xlu0 %v684, %s689
    %v691 = vpop.permute.xlu0 %690
    %v693 = vunpack.c.l.s4 1966171168
    %v694 = vunpack.c.0.s8 %v693
    %v695 = vlaneseq
    %v696 = vshrl.u32 %v695, 7
    %v697 = vsub.s32 %v694, %v696
    %v698 = vrot.slane %v74, %v697
    %v699 = vcombine.high %v698, %v698
    %v701 = vunpack.c.l.s4 1966171168
    %v702 = vunpack.c.0.s8 %v701
    %v703 = vlaneseq
    %v704 = vshrl.u32 %v703, 7
    %v705 = vsub.s32 %v702, %v704
    %v706 = vrot.slane %v698, %v705
    %v708 = vunpack.c.l.s4 1966171168
    %v709 = vunpack.c.0.s8 %v708
    %v710 = vlaneseq
    %v711 = vshrl.u32 %v710, 7
    %v712 = vsub.s32 %v709, %v711
    %v713 = vrot.slane %v699, %v712
    %v714 = vcombine.high %v706, %v706
    %v715 = vcombine.high %v713, %v713
    %v716 = vlaneseq
    %v717 = vshrl.u32 %v716, 7
    %v718 = vsub.s32 0, %v717
    %v719 = vrot.slane %v706, %v718
    %v720 = vlaneseq
    %v721 = vshrl.u32 %v720, 7
    %v722 = vsub.s32 0, %v721
    %v723 = vrot.slane %v713, %v722
    %v724 = vlaneseq
    %v725 = vshrl.u32 %v724, 7
    %v726 = vsub.s32 0, %v725
    %v727 = vrot.slane %v714, %v726
    %v728 = vlaneseq
    %v729 = vshrl.u32 %v728, 7
    %v730 = vsub.s32 0, %v729
    %v731 = vrot.slane %v715, %v730
    %vm732 = vcmp.eq.s32.totalorder %v654, %v719
    %vm733 = vcmp.eq.s32.totalorder %v658, %v719
    %vm734 = vcmp.eq.s32.totalorder %v665, %v723
    %vm735 = vcmp.eq.s32.totalorder %v669, %v723
    %vm736 = vcmp.eq.s32.totalorder %v676, %v727
    %vm737 = vcmp.eq.s32.totalorder %v680, %v727
    %vm738 = vcmp.eq.s32.totalorder %v687, %v731
    %vm739 = vcmp.eq.s32.totalorder %v691, %v731
    %vm740 = vmxor %vm585, 1
    %vm741 = vmxor %vm586, 1
    %v742 = vsel %vm740, 1, 0
    %v743 = vsel %vm741, 1, 0
    %vm744 = vcmp.eq.s32.totalorder %v742, 1
    %vm745 = vcmp.eq.s32.totalorder %v743, 1
    %vm746 = vmand %vm732, %vm744
    %vm747 = vmand %vm733, %vm745
    %vm748 = vmand %vm734, %vm744
    %vm749 = vmand %vm735, %vm745
    %vm750 = vmand %vm736, %vm744
    %vm751 = vmand %vm737, %vm745
    %vm752 = vmand %vm738, %vm744
    %vm753 = vmand %vm739, %vm745
    %v754 = vsel %vm746, 1, 0
    %v755 = vsel %vm747, 1, 0
    %v756 = vsel %vm748, 1, 0
    %v757 = vsel %vm749, 1, 0
    %v758 = vsel %vm750, 1, 0
    %v759 = vsel %vm751, 1, 0
    %v760 = vsel %vm752, 1, 0
    %v761 = vsel %vm753, 1, 0
    %v762 = vcvt.s32.f32 %v754
    %v763 = vcvt.s32.f32 %v755
    %v764 = vcvt.s32.f32 %v756
    %v765 = vcvt.s32.f32 %v757
    %v766 = vcvt.s32.f32 %v758
    %v767 = vcvt.s32.f32 %v759
    %v768 = vcvt.s32.f32 %v760
    %v769 = vcvt.s32.f32 %v761
    %v770 = vsel %vm623, %v762, 0.0
    %771 = vadd.xlane.f32.xlu0 %v770
    %v772 = vpop.xlane.xlu0 %771
    %v773 = vsel %vm623, %v763, 0.0
    %774 = vadd.xlane.f32.xlu0 %v773
    %v775 = vpop.xlane.xlu0 %774
    %v776 = vsel %vm623, %v764, 0.0
    %777 = vadd.xlane.f32.xlu0 %v776
    %v778 = vpop.xlane.xlu0 %777
    %v779 = vsel %vm623, %v765, 0.0
    %780 = vadd.xlane.f32.xlu0 %v779
    %v781 = vpop.xlane.xlu0 %780
    %v782 = vsel %vm623, %v766, 0.0
    %783 = vadd.xlane.f32.xlu0 %v782
    %v784 = vpop.xlane.xlu0 %783
    %v785 = vsel %vm623, %v767, 0.0
    %786 = vadd.xlane.f32.xlu0 %v785
    %v787 = vpop.xlane.xlu0 %786
    %v788 = vsel %vm623, %v768, 0.0
    %789 = vadd.xlane.f32.xlu0 %v788
    %v790 = vpop.xlane.xlu0 %789
    %v791 = vsel %vm623, %v769, 0.0
    %792 = vadd.xlane.f32.xlu0 %v791
    %v793 = vpop.xlane.xlu0 %792
    %v794 = vsel %vm746, %v307, 0.0
    %v795 = vsel %vm747, %v312, 0.0
    %v796 = vsel %vm748, %v394, 0.0
    %v797 = vsel %vm749, %v399, 0.0
    %v798 = vsel %vm750, %v481, 0.0
    %v799 = vsel %vm751, %v486, 0.0
    %v800 = vsel %vm752, %v568, 0.0
    %v801 = vsel %vm753, %v573, 0.0
    %v802 = vsel %vm623, %v794, 0.0
    %803 = vadd.xlane.f32.xlu0 %v802
    %v804 = vpop.xlane.xlu0 %803
    %v805 = vsel %vm623, %v795, 0.0
    %806 = vadd.xlane.f32.xlu0 %v805
    %v807 = vpop.xlane.xlu0 %806
    %v808 = vsel %vm623, %v796, 0.0
    %809 = vadd.xlane.f32.xlu0 %v808
    %v810 = vpop.xlane.xlu0 %809
    %v811 = vsel %vm623, %v797, 0.0
    %812 = vadd.xlane.f32.xlu0 %v811
    %v813 = vpop.xlane.xlu0 %812
    %v814 = vsel %vm623, %v798, 0.0
    %815 = vadd.xlane.f32.xlu0 %v814
    %v816 = vpop.xlane.xlu0 %815
    %v817 = vsel %vm623, %v799, 0.0
    %818 = vadd.xlane.f32.xlu0 %v817
    %v819 = vpop.xlane.xlu0 %818
    %v820 = vsel %vm623, %v800, 0.0
    %821 = vadd.xlane.f32.xlu0 %v820
    %v822 = vpop.xlane.xlu0 %821
    %v823 = vsel %vm623, %v801, 0.0
    %824 = vadd.xlane.f32.xlu0 %v823
    %v825 = vpop.xlane.xlu0 %824
    %v826 = vmul.f32 %v220, %v772
    %v827 = vmul.f32 %v221, %v775
    %v828 = vmul.f32 %v222, %v778
    %v829 = vmul.f32 %v223, %v781
    %v830 = vmul.f32 %v224, %v784
    %v831 = vmul.f32 %v225, %v787
    %v832 = vmul.f32 %v226, %v790
    %v833 = vmul.f32 %v227, %v793
    %v834 = vsub.f32 %v804, %v826
    %v835 = vsub.f32 %v807, %v827
    %v836 = vsub.f32 %v810, %v828
    %v837 = vsub.f32 %v813, %v829
    %v838 = vsub.f32 %v816, %v830
    %v839 = vsub.f32 %v819, %v831
    %v840 = vsub.f32 %v822, %v832
    %v841 = vsub.f32 %v825, %v833
    %v842 = vlog2.pop %v626
    %v843 = vmul.f32 %v842, 0.6931472
    %v844 = vlog2.pop %v629
    %v845 = vmul.f32 %v844, 0.6931472
    %v846 = vlog2.pop %v632
    %v847 = vmul.f32 %v846, 0.6931472
    %v848 = vlog2.pop %v635
    %v849 = vmul.f32 %v848, 0.6931472
    %v850 = vlog2.pop %v638
    %v851 = vmul.f32 %v850, 0.6931472
    %v852 = vlog2.pop %v641
    %v853 = vmul.f32 %v852, 0.6931472
    %v854 = vlog2.pop %v644
    %v855 = vmul.f32 %v854, 0.6931472
    %v856 = vlog2.pop %v647
    %v857 = vmul.f32 %v856, 0.6931472
    %v858 = vmul.f32 %v843, %v772
    %v859 = vmul.f32 %v845, %v775
    %v860 = vmul.f32 %v847, %v778
    %v861 = vmul.f32 %v849, %v781
    %v862 = vmul.f32 %v851, %v784
    %v863 = vmul.f32 %v853, %v787
    %v864 = vmul.f32 %v855, %v790
    %v865 = vmul.f32 %v857, %v793
    %v866 = vsub.f32 %v834, %v858
    %v867 = vsub.f32 %v835, %v859
    %v868 = vsub.f32 %v836, %v860
    %v869 = vsub.f32 %v837, %v861
    %v870 = vsub.f32 %v838, %v862
    %v871 = vsub.f32 %v839, %v863
    %v872 = vsub.f32 %v840, %v864
    %v873 = vsub.f32 %v841, %v865
    %vm874 = vcmp.gt.f32.partialorder %v772, 0.5
    %vm875 = vcmp.gt.f32.partialorder %v775, 0.5
    %vm876 = vcmp.gt.f32.partialorder %v778, 0.5
    %vm877 = vcmp.gt.f32.partialorder %v781, 0.5
    %vm878 = vcmp.gt.f32.partialorder %v784, 0.5
    %vm879 = vcmp.gt.f32.partialorder %v787, 0.5
    %vm880 = vcmp.gt.f32.partialorder %v790, 0.5
    %vm881 = vcmp.gt.f32.partialorder %v793, 0.5
    %v882 = vadd.f32 %v772, 1e-16
    %v883 = vadd.f32 %v775, 1e-16
    %v884 = vadd.f32 %v778, 1e-16
    %v885 = vadd.f32 %v781, 1e-16
    %v886 = vadd.f32 %v784, 1e-16
    %v887 = vadd.f32 %v787, 1e-16
    %v888 = vadd.f32 %v790, 1e-16
    %v889 = vadd.f32 %v793, 1e-16
    %v890 = vrcp.pop %v882
    %v891 = vmul.f32 %v866, %v890
    %v892 = vrcp.pop %v883
    %v893 = vmul.f32 %v867, %v892
    %v894 = vrcp.pop %v884
    %v895 = vmul.f32 %v868, %v894
    %v896 = vrcp.pop %v885
    %v897 = vmul.f32 %v869, %v896
    %v898 = vrcp.pop %v886
    %v899 = vmul.f32 %v870, %v898
    %v900 = vrcp.pop %v887
    %v901 = vmul.f32 %v871, %v900
    %v902 = vrcp.pop %v888
    %v903 = vmul.f32 %v872, %v902
    %v904 = vrcp.pop %v889
    %v905 = vmul.f32 %v873, %v904
    %v906 = vsel %vm874, %v891, 0.0
    %v907 = vsel %vm875, %v893, 0.0
    %v908 = vsel %vm876, %v895, 0.0
    %v909 = vsel %vm877, %v897, 0.0
    %v910 = vsel %vm878, %v899, 0.0
    %v911 = vsel %vm879, %v901, 0.0
    %v912 = vsel %vm880, %v903, 0.0
    %v913 = vsel %vm881, %v905, 0.0
    %v914 = vmul.f32 %v906, -1.0
    %v915 = vmul.f32 %v907, -1.0
    %v916 = vmul.f32 %v908, -1.0
    %v917 = vmul.f32 %v909, -1.0
    %v918 = vmul.f32 %v910, -1.0
    %v919 = vmul.f32 %v911, -1.0
    %v920 = vmul.f32 %v912, -1.0
    %v921 = vmul.f32 %v913, -1.0
    %v930 = vlaneseq
    %v931 = vshrl.u32 %v930, 7
    %v932 = vsub.s32 %v584, %v931
    %v933 = vrot.slane %v914, %v932
    %v934 = vadd.s32 %v584, 4294967288
    %v935 = vlaneseq
    %v936 = vshrl.u32 %v935, 7
    %v937 = vsub.s32 %v934, %v936
    %v938 = vrot.slane %v915, %v937
    %vm939 = vcmask 130112
    %v940 = vsel %vm939, %v938, %v933
    %v941 = vlaneseq
    %v942 = vshrl.u32 %v941, 7
    %v943 = vsub.s32 %v584, %v942
    %v944 = vrot.slane %v916, %v943
    %v945 = vlaneseq
    %v946 = vshrl.u32 %v945, 7
    %v947 = vsub.s32 %v934, %v946
    %v948 = vrot.slane %v917, %v947
    %v949 = vsel %vm939, %v948, %v944
    %v950 = vlaneseq
    %v951 = vshrl.u32 %v950, 7
    %v952 = vsub.s32 %v584, %v951
    %v953 = vrot.slane %v918, %v952
    %v954 = vlaneseq
    %v955 = vshrl.u32 %v954, 7
    %v956 = vsub.s32 %v934, %v955
    %v957 = vrot.slane %v919, %v956
    %v958 = vsel %vm939, %v957, %v953
    %v959 = vlaneseq
    %v960 = vshrl.u32 %v959, 7
    %v961 = vsub.s32 %v584, %v960
    %v962 = vrot.slane %v920, %v961
    %v963 = vlaneseq
    %v964 = vshrl.u32 %v963, 7
    %v965 = vsub.s32 %v934, %v964
    %v966 = vrot.slane %v921, %v965
    %v967 = vsel %vm939, %v966, %v962
    %vm968 = vcmask 1041409
    %v969 = vsel %vm968, %v949, %v940
    %vm970 = vcmask 1042434
    %v971 = vsel %vm970, %v958, %v969
    %vm972 = vcmask 1043459
    %v973 = vsel %vm972, %v967, %v971
    %vm975 = vcmask 125952
    %976 = vst.msk [vmem:[#allocation8] sm:$0xf] %vm975, %v973
    // Predicated region
    $region30: #{tpu_custom_call.1} parent=1 // pred_check
      _
    $region31: #{tpu_custom_call.1} parent=1 // pred_check_branch
      %978 = sbr.rel (0) target = $region33
    $region32: #{tpu_custom_call.1} parent=1 // pred_region
      %s980 = ssub.s32 64, 64
      %981 = vsyncadd [#allocation4], %s980
      %s983 = sshll.u32 [#allocation8], 4
      %s984 = int_to_ptr.vmem [resolvable:$true] %s983
      %986 = dma.vmem_to_hbm [thread:$0]  %s984, 64, %s4, [#allocation4]
    $region33: #{tpu_custom_call.1} parent=1 // pred_fallthru
      _
    // Predicated region
    $region34: #{tpu_custom_call.1} parent=1 // pred_check
      _
    $region35: #{tpu_custom_call.1} parent=1 // pred_check_branch
      %988 = sbr.rel (0) target = $region37
    $region36: #{tpu_custom_call.1} parent=1 // pred_region
      %989 = dma.done [#allocation4], 64
    $region37: #{tpu_custom_call.1} parent=1 // pred_fallthru
      _
    %990 = vsyncpa [#allocation3], 1
    %991 = vsyncpa [#allocation6], 1
    %992 = vsyncpa [#allocation4], 1

</llo_original>
